<compile_context>
chip_gen: v6e
topology: v6e:2x2x1
jax: 0.10.0
libtpu: 0.0.40
codegen_flags: <defaults>
</compile_context>

<pallas_src>
import functools
import math

import jax
import jax.numpy as jnp
from jax.experimental import pallas as pl
from jax.experimental.pallas import tpu as pltpu


_TARGET_BLOCK_BYTES = 8 * 1024 * 1024    # input bytes per grid step
_TEMP_VMEM_BUDGET = 40 * 1024 * 1024     # budget for block + roll/diff temps


def _tv_kernel(x_ref, hacc_ref, wacc_ref, hmask_ref, wmask_ref, *,
               img_h, img_w, lanes, period, rows_per_img,
               block_rows, blocks_per_core, total_rows, ragged):
    # x_ref block: (block_rows, lanes) rows of the fully-flattened image stack;
    #   blocks always start at an image boundary (block_rows % rows_per_img==0).
    # hacc_ref/wacc_ref: (1, period, lanes) f32 accumulators, resident across
    #   the inner ("arbitrary") grid axis; one block per core.
    # hmask_ref/wmask_ref: (period, lanes) f32 boundary masks, built once.
    j = pl.program_id(1)

    @pl.when(j == 0)
    def _init():
        hacc_ref[...] = jnp.zeros_like(hacc_ref)
        wacc_ref[...] = jnp.zeros_like(wacc_ref)
        q = jax.lax.broadcasted_iota(jnp.int32, (period, lanes), 0)
        p = jax.lax.broadcasted_iota(jnp.int32, (period, lanes), 1)
        pos = (q % rows_per_img) * lanes + p          # position inside its image
        hmask_ref[...] = (pos < (img_h - 1) * img_w).astype(jnp.float32)
        wmask_ref[...] = (p % img_w != img_w - 1).astype(jnp.float32)

    x = x_ref[...]                                    # (block_rows, lanes)
    tr, L = x.shape

    if ragged:
        # Zero rows past the real data (partial tail block / clamped blocks).
        lb = pl.program_id(0) * blocks_per_core + j   # logical block id
        r_glob = jax.lax.broadcasted_iota(jnp.int32, (tr, L), 0) + lb * block_rows
        x = jnp.where(r_glob < total_rows, x, jnp.zeros_like(x))

    # Neighbour at flat stride W (h-direction) via XLU rolls.
    x_down = pltpu.roll(x, tr - 1, 0)                 # row r -> row r+1 (mod tr)
    if L == img_w:
        x_next_h = x_down                             # wide path: plain sublane roll
    else:
        lane = jax.lax.broadcasted_iota(jnp.int32, (tr, L), 1)
        carry = jnp.where(lane < img_w, x_down, x)    # carry across packed rows
        x_next_h = pltpu.roll(carry, L - img_w, 1)    # lane p -> p+W (mod L)
    # Neighbour at flat stride 1 (w-direction).
    x_right = pltpu.roll(x, L - 1, 1)                 # lane p -> p+1 (mod L)

    # Diff in the input dtype, widen to f32 only for the square/accumulate.
    dh = (x_next_h - x).astype(jnp.float32)
    dw = (x_right - x).astype(jnp.float32)

    # Partial row reduction (block_rows, L) -> (period, L).  The boundary
    # masks are constant within each row-mod-period class, so they can be
    # applied after the reduction: one multiply per accumulator vreg instead
    # of per-element iota/mod/where work.
    # (MXU ones-vector reduction intentionally skipped: saves ~1 VALU op/vreg
    #  but risks bf16-pass matmul precision for the f32 sums.)
    if tr == period:
        hpart = dh * dh
        wpart = dw * dw
    else:
        n = tr // period
        hpart = jnp.sum((dh * dh).reshape(n, period, L), axis=0)
        wpart = jnp.sum((dw * dw).reshape(n, period, L), axis=0)
    hacc_ref[0] += hpart * hmask_ref[...]
    wacc_ref[0] += wpart * wmask_ref[...]


def tv_loss(x, tvloss_weight=0.2):
    """Pallas implementation of TVLoss.forward for NCHW input x."""
    b, c, h, w = x.shape
    bc = b * c
    isz = jnp.dtype(x.dtype).itemsize
    subl = max(8, 32 // isz)              # sublane tile: 8 f32 / 16 bf16 / 32 int8

    # ---- lane packing: view x as (total_rows, lanes), lanes a multiple of W.
    if w >= 128 or 128 % w != 0:
        lanes = w                         # wide path: lane index == image column
    else:
        k = 1
        for cand in range(128 // w, 0, -1):   # largest divisor of H with W*cand<=128
            if h % cand == 0:
                k = cand
                break
        lanes = w * k
    rows_per_img = (h * w) // lanes
    total_rows = bc * rows_per_img
    align = rows_per_img * subl // math.gcd(rows_per_img, subl)   # lcm

    # ---- block sizing: ~8 MiB of input, capped by an explicit VMEM estimate
    #      (double-buffered input + ~6 f32-sized temporaries) so everything
    #      fits v7x's 64 MiB VMEM with headroom.  Pathological single-image
    #      shapes (one image chunk larger than the budget) fall back to one
    #      whole-image block and may need more VMEM.
    row_in = lanes * isz
    row_est = 2 * row_in + 6 * lanes * 4
    cap_rows = min(_TARGET_BLOCK_BYTES // row_in, _TEMP_VMEM_BUDGET // row_est)
    cap_rows = max(align, cap_rows // align * align)

    if total_rows <= align:
        block_rows, period, num_blocks, num_cores = total_rows, total_rows, 1, 1
    else:
        period = align
        full_rows = (total_rows // align) * align
        nb_min = -(-total_rows // min(cap_rows, full_rows))
        # v7x TensorCore split; on 1-TC chips this is just a cheap serial loop
        # (at most one clamped duplicate tail block, no padding copy).
        num_cores = 2 if nb_min >= 2 else 1
        nb_target = -(-nb_min // num_cores) * num_cores
        block_rows = -(-total_rows // (nb_target * align)) * align
        block_rows = max(align, min(block_rows, full_rows, cap_rows))
        num_blocks = -(-total_rows // block_rows)

    bpc = -(-num_blocks // num_cores)
    ragged = (total_rows % block_rows != 0) or (num_cores * bpc != num_blocks)

    vmem_limit = max(
        32 * 1024 * 1024,
        2 * block_rows * row_in + 6 * block_rows * lanes * 4
        + 4 * period * lanes * 4 + (8 << 20),
    )

    x2d = x.reshape(total_rows, lanes)    # contiguous view of NCHW, no HBM copy

    kernel = functools.partial(
        _tv_kernel, img_h=h, img_w=w, lanes=lanes, period=period,
        rows_per_img=rows_per_img, block_rows=block_rows,
        blocks_per_core=bpc, total_rows=total_rows, ragged=ragged)

    def in_map(core, j):
        # Clamp fully out-of-range logical blocks to the last real block; the
        # in-kernel row-validity select zeroes their contribution.
        return (jnp.minimum(core * bpc + j, num_blocks - 1), 0)

    h_acc, w_acc = pl.pallas_call(
        kernel,
        out_shape=(
            jax.ShapeDtypeStruct((num_cores, period, lanes), jnp.float32),
            jax.ShapeDtypeStruct((num_cores, period, lanes), jnp.float32),
        ),
        grid_spec=pltpu.PrefetchScalarGridSpec(
            num_scalar_prefetch=0,
            grid=(num_cores, bpc),
            in_specs=[pl.BlockSpec((block_rows, lanes), in_map)],
            out_specs=[
                pl.BlockSpec((1, period, lanes), lambda core, j: (core, 0, 0)),
                pl.BlockSpec((1, period, lanes), lambda core, j: (core, 0, 0)),
            ],
            scratch_shapes=[
                pltpu.VMEM((period, lanes), jnp.float32),
                pltpu.VMEM((period, lanes), jnp.float32),
            ],
        ),
        compiler_params=pltpu.CompilerParams(
            dimension_semantics=("parallel", "arbitrary"),
            vmem_limit_bytes=vmem_limit,
        ),
    )(x2d)

    h_tv = jnp.sum(h_acc)
    w_tv = jnp.sum(w_acc)

    # Counts match PyTorch's _tensor_size: C*(H-1)*W and C*H*(W-1).
    # (H==1 or W==1 divides by zero -> inf/nan, same tensor/0 behavior as the
    #  original module rather than raising.)
    count_h = c * (h - 1) * w
    count_w = c * h * (w - 1)
    return tvloss_weight * 2.0 * (h_tv / count_h + w_tv / count_w) / b


def _tv_loss_ref(x, tvloss_weight=0.2):
    b, c, h, w = x.shape
    h_tv = jnp.sum((x[:, :, 1:, :] - x[:, :, :-1, :]) ** 2)
    w_tv = jnp.sum((x[:, :, :, 1:] - x[:, :, :, :-1]) ** 2)
    count_h = c * (h - 1) * w
    count_w = c * h * (w - 1)
    return tvloss_weight * 2.0 * (h_tv / count_h + w_tv / count_w) / b


if __name__ == "__main__":
    key = jax.random.PRNGKey(0)
    x = jax.random.normal(key, (2, 4, 16, 16), dtype=jnp.float32)

    out = jax.block_until_ready(tv_loss(x))
    ref = _tv_loss_ref(x)
    assert jnp.allclose(out, ref, rtol=1e-5, atol=1e-5), (out, ref)
    print("KERNEL_OK")
</pallas_src>

<mosaic_0001>
module attributes {stable_mosaic.version = 11 : i64} {
  func.func @_tv_kernel(%arg0: i32, %arg1: i32, %arg2: memref<16x128xf32, #tpu.memory_space<vmem>>, %arg3: memref<1x8x128xf32, #tpu.memory_space<vmem>>, %arg4: memref<1x8x128xf32, #tpu.memory_space<vmem>>, %arg5: memref<8x128xf32, #tpu.memory_space<vmem>>, %arg6: memref<8x128xf32, #tpu.memory_space<vmem>>) attributes {dimension_semantics = [#tpu.dimension_semantics<parallel>, #tpu.dimension_semantics<arbitrary>], iteration_bounds = array<i64: 1, 1>, scalar_prefetch = 0 : i64, scratch_operands = 2 : i64, tpu.core_type = #tpu.core_type<tc>, window_params = [{transform_indices = @transform_0, window_bounds = array<i64: 16, 128>}, {transform_indices = @transform_1, window_bounds = array<i64: 1, 8, 128>}, {transform_indices = @transform_2, window_bounds = array<i64: 1, 8, 128>}]} {
    %c0_i32 = arith.constant 0 : i32
    %0 = arith.cmpi eq, %arg1, %c0_i32 : i32
    %1 = arith.extui %0 : i1 to i32
    %c0_i32_0 = arith.constant 0 : i32
    %2 = arith.cmpi ne, %1, %c0_i32_0 : i32
    scf.if %2 {
      %cst_19 = arith.constant 0.000000e+00 : f32
      %35 = vector.broadcast %cst_19 : f32 to vector<1x8x128xf32>
      %c0_20 = arith.constant 0 : index
      %c0_21 = arith.constant 0 : index
      %c0_22 = arith.constant 0 : index
      %36 = vector.load %arg3[%c0_20, %c0_21, %c0_22] : memref<1x8x128xf32, #tpu.memory_space<vmem>>, vector<1x8x128xf32>
      tpu.vector_store %arg3[%c0_20, %c0_21, %c0_22], %35 {strides = array<i32>} : memref<1x8x128xf32, #tpu.memory_space<vmem>>, vector<1x8x128xf32>,
      %cst_23 = arith.constant 0.000000e+00 : f32
      %37 = vector.broadcast %cst_23 : f32 to vector<1x8x128xf32>
      %c0_24 = arith.constant 0 : index
      %c0_25 = arith.constant 0 : index
      %c0_26 = arith.constant 0 : index
      %38 = vector.load %arg4[%c0_24, %c0_25, %c0_26] : memref<1x8x128xf32, #tpu.memory_space<vmem>>, vector<1x8x128xf32>
      tpu.vector_store %arg4[%c0_24, %c0_25, %c0_26], %37 {strides = array<i32>} : memref<1x8x128xf32, #tpu.memory_space<vmem>>, vector<1x8x128xf32>,
      %39 = tpu.iota {dimensions = array<i32: 0>} : vector<8x128xi32>
      %40 = tpu.iota {dimensions = array<i32: 1>} : vector<8x128xi32>
      %c2_i32 = arith.constant 2 : i32
      %c0_i32_27 = arith.constant 0 : i32
      %41 = arith.cmpi eq, %c2_i32, %c0_i32_27 : i32
      %c1_i32 = arith.constant 1 : i32
      %42 = arith.select %41, %c1_i32, %c2_i32 : i32
      %43 = vector.broadcast %42 : i32 to vector<8x128xi32>
      %44 = arith.remsi %39, %43 : vector<8x128xi32>
      %c0_i32_28 = arith.constant 0 : i32
      %45 = vector.broadcast %c0_i32_28 : i32 to vector<8x128xi32>
      %46 = arith.cmpi ne, %44, %45 : vector<8x128xi32>
      %c0_i32_29 = arith.constant 0 : i32
      %47 = vector.broadcast %c0_i32_29 : i32 to vector<8x128xi32>
      %48 = arith.cmpi slt, %44, %47 : vector<8x128xi32>
      %c0_i32_30 = arith.constant 0 : i32
      %49 = arith.cmpi slt, %42, %c0_i32_30 : i32
      %50 = vector.broadcast %49 : i1 to vector<8x128xi1>
      %51 = vector.broadcast %50 : vector<8x128xi1> to vector<8x128xi1>
      %52 = arith.xori %48, %51 : vector<8x128xi1>
      %53 = arith.andi %52, %46 : vector<8x128xi1>
      %54 = vector.broadcast %42 : i32 to vector<8x128xi32>
      %55 = arith.addi %44, %54 : vector<8x128xi32>
      %56 = arith.select %53, %55, %44 : vector<8x128xi1>, vector<8x128xi32>
      %c128_i32 = arith.constant 128 : i32
      %57 = vector.broadcast %c128_i32 : i32 to vector<8x128xi32>
      %58 = arith.muli %56, %57 : vector<8x128xi32>
      %59 = arith.addi %58, %40 : vector<8x128xi32>
      %c240_i32 = arith.constant 240 : i32
      %60 = vector.broadcast %c240_i32 : i32 to vector<8x128xi32>
      %61 = arith.cmpi slt, %59, %60 : vector<8x128xi32>
      %62 = arith.extui %61 : vector<8x128xi1> to vector<8x128xi32>
      %63 = arith.sitofp %62 : vector<8x128xi32> to vector<8x128xf32>
      %c0_31 = arith.constant 0 : index
      %c0_32 = arith.constant 0 : index
      %64 = vector.load %arg5[%c0_31, %c0_32] : memref<8x128xf32, #tpu.memory_space<vmem>>, vector<8x128xf32>
      tpu.vector_store %arg5[%c0_31, %c0_32], %63 {strides = array<i32>} : memref<8x128xf32, #tpu.memory_space<vmem>>, vector<8x128xf32>,
      %c16_i32_33 = arith.constant 16 : i32
      %c0_i32_34 = arith.constant 0 : i32
      %65 = arith.cmpi eq, %c16_i32_33, %c0_i32_34 : i32
      %c1_i32_35 = arith.constant 1 : i32
      %66 = arith.select %65, %c1_i32_35, %c16_i32_33 : i32
      %67 = vector.broadcast %66 : i32 to vector<8x128xi32>
      %68 = arith.remsi %40, %67 : vector<8x128xi32>
      %c0_i32_36 = arith.constant 0 : i32
      %69 = vector.broadcast %c0_i32_36 : i32 to vector<8x128xi32>
      %70 = arith.cmpi ne, %68, %69 : vector<8x128xi32>
      %c0_i32_37 = arith.constant 0 : i32
      %71 = vector.broadcast %c0_i32_37 : i32 to vector<8x128xi32>
      %72 = arith.cmpi slt, %68, %71 : vector<8x128xi32>
      %c0_i32_38 = arith.constant 0 : i32
      %73 = arith.cmpi slt, %66, %c0_i32_38 : i32
      %74 = vector.broadcast %73 : i1 to vector<8x128xi1>
      %75 = vector.broadcast %74 : vector<8x128xi1> to vector<8x128xi1>
      %76 = arith.xori %72, %75 : vector<8x128xi1>
      %77 = arith.andi %76, %70 : vector<8x128xi1>
      %78 = vector.broadcast %66 : i32 to vector<8x128xi32>
      %79 = arith.addi %68, %78 : vector<8x128xi32>
      %80 = arith.select %77, %79, %68 : vector<8x128xi1>, vector<8x128xi32>
      %c15_i32_39 = arith.constant 15 : i32
      %81 = vector.broadcast %c15_i32_39 : i32 to vector<8x128xi32>
      %82 = arith.cmpi ne, %80, %81 : vector<8x128xi32>
      %83 = arith.extui %82 : vector<8x128xi1> to vector<8x128xi32>
      %84 = arith.sitofp %83 : vector<8x128xi32> to vector<8x128xf32>
      %c0_40 = arith.constant 0 : index
      %c0_41 = arith.constant 0 : index
      %85 = vector.load %arg6[%c0_40, %c0_41] : memref<8x128xf32, #tpu.memory_space<vmem>>, vector<8x128xf32>
      tpu.vector_store %arg6[%c0_40, %c0_41], %84 {strides = array<i32>} : memref<8x128xf32, #tpu.memory_space<vmem>>, vector<8x128xf32>,
    } else {
    }
    %c0 = arith.constant 0 : index
    %c0_1 = arith.constant 0 : index
    %3 = vector.load %arg2[%c0, %c0_1] : memref<16x128xf32, #tpu.memory_space<vmem>>, vector<16x128xf32>
    %c15_i32 = arith.constant 15 : i32
    %4 = tpu.dynamic_rotate %3 by %c15_i32 dim 0 : vector<16x128xf32>, i32 -> vector<16x128xf32>
    %5 = tpu.iota {dimensions = array<i32: 1>} : vector<16x128xi32>
    %c16_i32 = arith.constant 16 : i32
    %6 = vector.broadcast %c16_i32 : i32 to vector<16x128xi32>
    %7 = arith.cmpi slt, %5, %6 : vector<16x128xi32>
    %8 = arith.select %7, %4, %3 : vector<16x128xi1>, vector<16x128xf32>
    %c112_i32 = arith.constant 112 : i32
    %9 = tpu.dynamic_rotate %8 by %c112_i32 dim 1 : vector<16x128xf32>, i32 -> vector<16x128xf32>
    %c127_i32 = arith.constant 127 : i32
    %10 = tpu.dynamic_rotate %3 by %c127_i32 dim 1 : vector<16x128xf32>, i32 -> vector<16x128xf32>
    %11 = arith.subf %9, %3 : vector<16x128xf32>
    %12 = arith.subf %10, %3 : vector<16x128xf32>
    %13 = arith.mulf %11, %11 : vector<16x128xf32>
    %14 = vector.shape_cast %13 : vector<16x128xf32> to vector<2x8x128xf32>
    %cst = arith.constant dense<0.000000e+00> : vector<8x128xf32>
    %15 = vector.multi_reduction <add>, %14, %cst [0] : vector<2x8x128xf32> to vector<8x128xf32>
    %16 = arith.mulf %12, %12 : vector<16x128xf32>
    %17 = vector.shape_cast %16 : vector<16x128xf32> to vector<2x8x128xf32>
    %cst_2 = arith.constant dense<0.000000e+00> : vector<8x128xf32>
    %18 = vector.multi_reduction <add>, %17, %cst_2 [0] : vector<2x8x128xf32> to vector<8x128xf32>
    %c0_3 = arith.constant 0 : index
    %c0_4 = arith.constant 0 : index
    %c0_5 = arith.constant 0 : index
    %19 = vector.load %arg3[%c0_3, %c0_4, %c0_5] : memref<1x8x128xf32, #tpu.memory_space<vmem>>, vector<1x8x128xf32>
    %20 = vector.shape_cast %19 : vector<1x8x128xf32> to vector<8x128xf32>
    %c0_6 = arith.constant 0 : index
    %c0_7 = arith.constant 0 : index
    %21 = vector.load %arg5[%c0_6, %c0_7] : memref<8x128xf32, #tpu.memory_space<vmem>>, vector<8x128xf32>
    %22 = arith.mulf %15, %21 : vector<8x128xf32>
    %23 = arith.addf %20, %22 : vector<8x128xf32>
    %c0_8 = arith.constant 0 : index
    %c0_9 = arith.constant 0 : index
    %c0_10 = arith.constant 0 : index
    %24 = vector.load %arg3[%c0_8, %c0_9, %c0_10] : memref<1x8x128xf32, #tpu.memory_space<vmem>>, vector<1x8x128xf32>
    %25 = vector.shape_cast %24 : vector<1x8x128xf32> to vector<8x128xf32>
    %26 = vector.shape_cast %23 : vector<8x128xf32> to vector<1x8x128xf32>
    tpu.vector_store %arg3[%c0_8, %c0_9, %c0_10], %26 {strides = array<i32>} : memref<1x8x128xf32, #tpu.memory_space<vmem>>, vector<1x8x128xf32>,
    %c0_11 = arith.constant 0 : index
    %c0_12 = arith.constant 0 : index
    %c0_13 = arith.constant 0 : index
    %27 = vector.load %arg4[%c0_11, %c0_12, %c0_13] : memref<1x8x128xf32, #tpu.memory_space<vmem>>, vector<1x8x128xf32>
    %28 = vector.shape_cast %27 : vector<1x8x128xf32> to vector<8x128xf32>
    %c0_14 = arith.constant 0 : index
    %c0_15 = arith.constant 0 : index
    %29 = vector.load %arg6[%c0_14, %c0_15] : memref<8x128xf32, #tpu.memory_space<vmem>>, vector<8x128xf32>
    %30 = arith.mulf %18, %29 : vector<8x128xf32>
    %31 = arith.addf %28, %30 : vector<8x128xf32>
    %c0_16 = arith.constant 0 : index
    %c0_17 = arith.constant 0 : index
    %c0_18 = arith.constant 0 : index
    %32 = vector.load %arg4[%c0_16, %c0_17, %c0_18] : memref<1x8x128xf32, #tpu.memory_space<vmem>>, vector<1x8x128xf32>
    %33 = vector.shape_cast %32 : vector<1x8x128xf32> to vector<8x128xf32>
    %34 = vector.shape_cast %31 : vector<8x128xf32> to vector<1x8x128xf32>
    tpu.vector_store %arg4[%c0_16, %c0_17, %c0_18], %34 {strides = array<i32>} : memref<1x8x128xf32, #tpu.memory_space<vmem>>, vector<1x8x128xf32>,
    return
  }
  func.func @transform_0(%arg0: i32, %arg1: i32) -> (i32, i32) {
    %c1_i32 = arith.constant 1 : i32
    %0 = arith.muli %arg0, %c1_i32 : i32
    %1 = arith.addi %0, %arg1 : i32
    %c0_i32 = arith.constant 0 : i32
    %2 = arith.minsi %1, %c0_i32 : i32
    %c0_i32_0 = arith.constant 0 : i32
    %c0_i32_1 = arith.constant 0 : i32
    return %2, %c0_i32_0 : i32, i32
  }
  func.func @transform_1(%arg0: i32, %arg1: i32) -> (i32, i32, i32) {
    %c0_i32 = arith.constant 0 : i32
    %c0_i32_0 = arith.constant 0 : i32
    %c0_i32_1 = arith.constant 0 : i32
    return %arg0, %c0_i32, %c0_i32_0 : i32, i32, i32
  }
  func.func @transform_2(%arg0: i32, %arg1: i32) -> (i32, i32, i32) {
    %c0_i32 = arith.constant 0 : i32
    %c0_i32_0 = arith.constant 0 : i32
    %c0_i32_1 = arith.constant 0 : i32
    return %arg0, %c0_i32, %c0_i32_0 : i32, i32, i32
  }
}

</mosaic_0001>

<llo_original>
// kernel: tpu_custom_call.1
$region0: #{tpu_custom_call.1}
  #allocation0 [shape = 'u32[]', space=smem, size = 0x4, offset = 0x4, fixed_abs, tag = 'smem constant byte address 0x4 - core index']
  #allocation1 [shape = 'u32[144,128]{1,0:T(1,128)}', space=vmem, size = 0x12000, scoped, tag = 'internal scratch']
  #allocation2 [shape = 'f32[8,128]{1,0:T(8,128)}', space=vmem, size = 0x1000, scoped, tag = 'scratch operand']
  #allocation3 [shape = 'f32[8,128]{1,0:T(8,128)}', space=vmem, size = 0x1000, scoped, tag = 'scratch operand']
  %s0 = inlined_call_operand.hbm [shape: f32[16,128], index: 0, kind: input, shape index: {}]
  %s1 = inlined_call_operand.hbm [shape: f32[1,8,128], index: 1, kind: output, shape index: {0}]
  %s2 = inlined_call_operand.hbm [shape: f32[1,8,128], index: 2, kind: output, shape index: {1}]
  %3 = xla_tuple %s1, %s2
  %s4 = sld [smem:[#allocation0]]
  $region30: #{tpu_custom_call.1} parent=0
    _
  %s6 = ssub.s32 1, %s4
  %s7 = scalar_select 0, %s6, %s4
  $region1: #{tpu_custom_call.1} parent=0
    #allocation4 [shape = 'u8[8192]{0}', space=vmem, size = 0x2000, scoped, tag = 'input window, operand 0, single buffered']
    #allocation5 [shape = 's32[1]{0}', space=sflag, size = 0x4, scoped, tag = 'scoped memory for tpu_custom_call.1']
    #allocation6 [shape = 's32[1]{0}', space=sflag, size = 0x4, scoped, tag = 'scoped memory for tpu_custom_call.1']
    #allocation7 [shape = 'u8[4096]{0}', space=vmem, size = 0x1000, scoped, tag = 'output window, operand 0, single buffered']
    #allocation8 [shape = 'u8[4096]{0}', space=vmem, size = 0x1000, scoped, tag = 'output window, operand 1, single buffered']
    #allocation9 [shape = 's32[1]{0}', space=sflag, size = 0x4, scoped, tag = 'scoped memory for tpu_custom_call.1']
    %8 = vsyncpa [#allocation5], 0
    %9 = vsyncpa [#allocation6], 0
    %10 = vsyncpa [#allocation9], 0
    // Predicated region
    $region2: #{tpu_custom_call.1} parent=1 // pred_check
      _
    $region3: #{tpu_custom_call.1} parent=1 // pred_check_branch
      %12 = sbr.rel (0) target = $region5
    $region4: #{tpu_custom_call.1} parent=1 // pred_region
      %s13 = sadd.s32 0, 0
      %p14 = scmp.lt.s32.totalorder %s13, 0
      %s15 = scalar_select %p14, %s13, 0
      %s16 = smul.u32 2, %s15
      %s18 = ssub.s32 256, 256
      %19 = vsyncadd [#allocation5], %s18
      %s20 = smul.addr %s16, 128
      %s21 = scalar_lea.hbm %s0, %s20
      %s22 = sshll.u32 [#allocation4], 4
      %s23 = int_to_ptr.vmem [resolvable:$true] %s22
      %28 = dma.hbm_to_vmem [thread:$0]  %s21, 256, %s23, [#allocation5], 128, 128, 8
    $region5: #{tpu_custom_call.1} parent=1 // pred_fallthru
      _
    // Predicated region
    $region6: #{tpu_custom_call.1} parent=1 // pred_check
      _
    $region7: #{tpu_custom_call.1} parent=1 // pred_check_branch
      %30 = sbr.rel (0) target = $region9
    $region8: #{tpu_custom_call.1} parent=1 // pred_region
      %31 = dma.done [#allocation5], 256
    $region9: #{tpu_custom_call.1} parent=1 // pred_fallthru
      _
    %s32 = sadd.s32 0, 0
    %p33 = scmp.lt.s32.totalorder %s32, 0
    %s34 = scalar_select %p33, %s32, 0
    %s35 = smul.u32 2, %s34
    %p36 = scmp.eq.s32.totalorder 0, 0
    // Predicated region
    $region10: #{tpu_custom_call.1} parent=1 // pred_check
      %p37 = pneg %p36
    $region11: #{tpu_custom_call.1} parent=1 // pred_check_branch
      %39 = sbr.rel (%p37) target = $region13
    $region12: #{tpu_custom_call.1} parent=1 // pred_region
      %40 = vst [vmem:[#allocation7] sm:$0xff] 0.0
      %41 = vst [vmem:[#allocation8] sm:$0xff] 0.0
      %v42 = vlaneseq
      %v43 = vshrl.u32 %v42, 7
      %v44 = vlaneseq
      %v45 = vand.u32 %v44, 127
      %vm46 = vcmp.lt.s32.totalorder %v43, 0
      %v47 = vsub.s32 0, %v43
      %v48 = vsel %vm46, %v47, %v43
      %v49 = vshrl.u32 %v48, 1
      %v50 = vand.u32 %v48, 1
      %v51 = vsub.s32 0, %v50
      %v52 = vsel %vm46, %v51, %v50
      %vm53 = vcmp.ne.s32.totalorder %v52, 0
      %vm54 = vcmp.lt.s32.totalorder %v52, 0
      %vm55 = vmand %vm54, %vm53
      %v56 = vadd.s32 %v52, 2
      %v57 = vsel %vm55, %v56, %v52
      %v58 = vmul.u32 %v57, 128
      %v59 = vadd.s32 %v58, %v45
      %vm60 = vcmp.lt.s32.totalorder %v59, 240
      %v61 = vsel %vm60, 1, 0
      %v62 = vcvt.s32.f32 %v61
      %63 = vst [vmem:[#allocation2] sm:$0xff] %v62
      %vm64 = vcmp.lt.s32.totalorder %v45, 0
      %v65 = vsub.s32 0, %v45
      %v66 = vsel %vm64, %v65, %v45
      %v67 = vshrl.u32 %v66, 4
      %v68 = vand.u32 %v66, 15
      %v69 = vsub.s32 0, %v68
      %v70 = vsel %vm64, %v69, %v68
      %vm71 = vcmp.ne.s32.totalorder %v70, 0
      %vm72 = vcmp.lt.s32.totalorder %v70, 0
      %vm73 = vmand %vm72, %vm71
      %v74 = vadd.s32 %v70, 16
      %v75 = vsel %vm73, %v74, %v70
      %vm76 = vcmp.ne.s32.totalorder %v75, 15
      %v77 = vsel %vm76, 1, 0
      %v78 = vcvt.s32.f32 %v77
      %79 = vst [vmem:[#allocation3] sm:$0xff] %v78
    $region13: #{tpu_custom_call.1} parent=1 // pred_fallthru
      _
    %v80 = vld [vmem:[#allocation4] sm:$0xff]
    %v81 = vld [vmem:[#allocation4 + $0x8] sm:$0xff]
    %v82 = vrot.slane %v80, 1
    %v83 = vrot.slane %v81, 1
    %v84 = vlaneseq
    %v85 = vshrl.u32 %v84, 7
    %vm86 = vcmp.lt.s32.totalorder %v85, 7
    %v87 = vsel %vm86, %v82, %v83
    %v88 = vsel %vm86, %v83, %v82
    %v89 = vlaneseq
    %v90 = vand.u32 %v89, 127
    %vm91 = vcmp.lt.s32.totalorder %v90, 16
    %v92 = vsel %vm91, %v87, %v80
    %v93 = vsel %vm91, %v88, %v81
    %94 = vrot.lane.b32.xlu0 %v92, 112
    %v95 = vpop.permute.xlu0 %94
    %96 = vrot.lane.b32.xlu0 %v93, 112
    %v97 = vpop.permute.xlu0 %96
    %98 = vrot.lane.b32.xlu0 %v80, 127
    %v99 = vpop.permute.xlu0 %98
    %100 = vrot.lane.b32.xlu0 %v81, 127
    %v101 = vpop.permute.xlu0 %100
    %v102 = vsub.f32 %v95, %v80
    %v103 = vsub.f32 %v97, %v81
    %v104 = vsub.f32 %v99, %v80
    %v105 = vsub.f32 %v101, %v81
    %v106 = vmul.f32 %v102, %v102
    %v107 = vmul.f32 %v103, %v103
    %v108 = vadd.f32 %v106, %v107
    %v109 = vmul.f32 %v104, %v104
    %v110 = vmul.f32 %v105, %v105
    %v111 = vadd.f32 %v109, %v110
    %v112 = vld [vmem:[#allocation7] sm:$0xff]
    %v113 = vld [vmem:[#allocation2] sm:$0xff]
    %v114 = vmul.f32 %v108, %v113
    %v115 = vadd.f32 %v112, %v114
    %116 = vst [vmem:[#allocation7] sm:$0xff] %v115
    %v117 = vld [vmem:[#allocation8] sm:$0xff]
    %v118 = vld [vmem:[#allocation3] sm:$0xff]
    %v119 = vmul.f32 %v111, %v118
    %v120 = vadd.f32 %v117, %v119
    %121 = vst [vmem:[#allocation8] sm:$0xff] %v120
    // Predicated region
    $region14: #{tpu_custom_call.1} parent=1 // pred_check
      _
    $region15: #{tpu_custom_call.1} parent=1 // pred_check_branch
      %123 = sbr.rel (0) target = $region17
    $region16: #{tpu_custom_call.1} parent=1 // pred_region
      %s125 = ssub.s32 128, 128
      %126 = vsyncadd [#allocation6], %s125
      %s128 = sshll.u32 [#allocation7], 4
      %s129 = int_to_ptr.vmem [resolvable:$true] %s128
      %131 = dma.vmem_to_hbm [thread:$0]  %s129, 128, %s1, [#allocation6]
    $region17: #{tpu_custom_call.1} parent=1 // pred_fallthru
      _
    // Predicated region
    $region18: #{tpu_custom_call.1} parent=1 // pred_check
      _
    $region19: #{tpu_custom_call.1} parent=1 // pred_check_branch
      %133 = sbr.rel (0) target = $region21
    $region20: #{tpu_custom_call.1} parent=1 // pred_region
      %s135 = ssub.s32 128, 128
      %136 = vsyncadd [#allocation9], %s135
      %s138 = sshll.u32 [#allocation8], 4
      %s139 = int_to_ptr.vmem [resolvable:$true] %s138
      %141 = dma.vmem_to_hbm [thread:$0]  %s139, 128, %s2, [#allocation9]
    $region21: #{tpu_custom_call.1} parent=1 // pred_fallthru
      _
    // Predicated region
    $region22: #{tpu_custom_call.1} parent=1 // pred_check
      _
    $region23: #{tpu_custom_call.1} parent=1 // pred_check_branch
      %143 = sbr.rel (0) target = $region25
    $region24: #{tpu_custom_call.1} parent=1 // pred_region
      %144 = dma.done [#allocation6], 128
    $region25: #{tpu_custom_call.1} parent=1 // pred_fallthru
      _
    // Predicated region
    $region26: #{tpu_custom_call.1} parent=1 // pred_check
      _
    $region27: #{tpu_custom_call.1} parent=1 // pred_check_branch
      %146 = sbr.rel (0) target = $region29
    $region28: #{tpu_custom_call.1} parent=1 // pred_region
      %147 = dma.done [#allocation9], 128
    $region29: #{tpu_custom_call.1} parent=1 // pred_fallthru
      _
    %148 = vsyncpa [#allocation5], 1
    %149 = vsyncpa [#allocation6], 1
    %150 = vsyncpa [#allocation9], 1

</llo_original>
